<compile_context>
chip_gen: v7x
topology: tpu7x:2x2x1
jax: 0.10.0
libtpu: 0.0.40
codegen_flags: <defaults>
</compile_context>

<pallas_src>
import functools

import jax
import jax.numpy as jnp
from jax.experimental import pallas as pl
from jax.experimental.pallas import tpu as pltpu


def _ensemble_kernel(w_ref, b_ref, x_ref, o_ref, *, n_folds, c_in, c_out, sigmoid):
    """One grid step = one (batch, spatial-tile) pair; folds unrolled in-body.

    x_ref : (C_in,  tm) VMEM  (channels on sublanes, spatial on lanes)
    o_ref : (C_out, tm) VMEM
    w_ref : (n_folds * C_in * C_out,) f32 in SMEM  (flattened [f, ci, co])
    b_ref : (n_folds * C_out,)        f32 in SMEM  (flattened [f, co])
    """
    x = x_ref[...]                      # (c_in, tm) f32, lane-dense
    inv = 1.0 / n_folds
    for co in range(c_out):
        acc = None
        for f in range(n_folds):
            # VPU broadcast-FMA contraction over the (tiny) channel axis.
            p = x[0:1, :] * w_ref[(f * c_in + 0) * c_out + co]
            for ci in range(1, c_in):
                p = p + x[ci:ci + 1, :] * w_ref[(f * c_in + ci) * c_out + co]
            p = p + b_ref[f * c_out + co]
            if sigmoid:
                p = jax.nn.sigmoid(p)
            else:
                p = (p + 1.0) * 0.5
            acc = p if acc is None else acc + p
        # Full-lane (unmasked) store of one output-channel row.
        o_ref[co:co + 1, :] = acc * inv


def inference_model_pallas(x_nchw, weights, biases, *, sigmoid=False, tm_max=2048):
    """Pallas implementation of InferenceModel.forward.

    x_nchw : (N, C_in, H, W) float32
    weights: (n_folds, C_in, C_out) float32   (1x1 conv weights per fold)
    biases : (n_folds, 1, C_out)    float32   (conv bias per fold)
    returns: (N, C_out, H, W) float32
    """
    n_folds, c_in, c_out = weights.shape
    n, c, h, w = x_nchw.shape
    assert c == c_in
    hw = h * w

    if not sigmoid:
        # Averaging commutes with the affine map when there is no nonlinearity:
        # mean_f((x W_f + b_f + 1)/2) == (x W_avg + b_avg + 1)/2.
        weights = jnp.mean(weights, axis=0, keepdims=True)
        biases = jnp.mean(biases, axis=0, keepdims=True)
        n_folds = 1

    w_flat = weights.reshape(n_folds * c_in * c_out)
    b_flat = biases.reshape(n_folds * c_out)

    # NCHW -> (N, C_in, H*W): pure reshape, no transpose, no extra HBM traffic.
    x3d = x_nchw.reshape(n, c_in, hw)

    # Lane-dense spatial tile: multiple of 128, as large as reasonable.
    tm = min(tm_max, max(128, -(-hw // 128) * 128))
    hw_pad = -(-hw // tm) * tm
    if hw_pad != hw:
        x3d = jnp.pad(x3d, ((0, 0), (0, 0), (0, hw_pad - hw)))

    kernel = functools.partial(
        _ensemble_kernel, n_folds=n_folds, c_in=c_in, c_out=c_out, sigmoid=sigmoid
    )

    out3d = pl.pallas_call(
        kernel,
        out_shape=jax.ShapeDtypeStruct((n, c_out, hw_pad), jnp.float32),
        grid=(n, hw_pad // tm),
        in_specs=[
            pl.BlockSpec(memory_space=pltpu.MemorySpace.SMEM),   # weights (whole)
            pl.BlockSpec(memory_space=pltpu.MemorySpace.SMEM),   # biases  (whole)
            pl.BlockSpec((None, c_in, tm), lambda b, i: (b, 0, i)),
        ],
        out_specs=pl.BlockSpec((None, c_out, tm), lambda b, i: (b, 0, i)),
        compiler_params=pltpu.CompilerParams(
            dimension_semantics=("parallel", "parallel"),
        ),
    )(w_flat, b_flat, x3d)

    # (N, C_out, H*W) -> NCHW, dropping any spatial padding.
    return out3d[:, :, :hw].reshape(n, c_out, h, w)


def inference_model_ref(x_nchw, weights, biases, *, sigmoid=False):
    """Pure-JAX reference mirroring the PyTorch forward loop exactly."""
    n_folds = weights.shape[0]
    n, c, h, w = x_nchw.shape
    x2d = jnp.transpose(x_nchw, (0, 2, 3, 1)).reshape(n * h * w, c)
    res = 0.0
    for f in range(n_folds):
        pred = x2d @ weights[f] + biases[f, 0]
        pred = jax.nn.sigmoid(pred) if sigmoid else (pred + 1.0) / 2.0
        res = res + pred
    res = res / n_folds
    return jnp.transpose(res.reshape(n, h, w, -1), (0, 3, 1, 2))


if __name__ == "__main__":
    key = jax.random.PRNGKey(0)
    k_x, k_w, k_b = jax.random.split(key, 3)

    N, C_IN, H, W = 2, 4, 16, 16
    C_OUT = 2
    N_FOLDS = 5

    x = jax.random.normal(k_x, (N, C_IN, H, W), dtype=jnp.float32)
    weights = 0.1 * jax.random.normal(k_w, (N_FOLDS, C_IN, C_OUT), dtype=jnp.float32)
    biases = 0.1 * jax.random.normal(k_b, (N_FOLDS, 1, C_OUT), dtype=jnp.float32)

    for use_sigmoid in (False, True):
        out = inference_model_pallas(x, weights, biases, sigmoid=use_sigmoid)
        out = jax.block_until_ready(out)
        ref = inference_model_ref(x, weights, biases, sigmoid=use_sigmoid)
        assert out.shape == (N, C_OUT, H, W)
        assert jnp.allclose(out, ref, atol=1e-5, rtol=1e-5), "mismatch vs reference"

    print("KERNEL_OK")
</pallas_src>

<mosaic_0001>
module attributes {stable_mosaic.version = 11 : i64} {
  func.func @_ensemble_kernel(%arg0: i32, %arg1: i32, %arg2: memref<8xf32, #tpu.memory_space<smem>>, %arg3: memref<2xf32, #tpu.memory_space<smem>>, %arg4: memref<1x4x256xf32, #tpu.memory_space<vmem>>, %arg5: memref<1x2x256xf32, #tpu.memory_space<vmem>>) attributes {dimension_semantics = [#tpu.dimension_semantics<parallel>, #tpu.dimension_semantics<parallel>], iteration_bounds = array<i64: 2, 1>, scalar_prefetch = 0 : i64, scratch_operands = 0 : i64, tpu.core_type = #tpu.core_type<tc>, window_params = [{transform_indices = @transform_0, window_bounds = array<i64: 8>}, {transform_indices = @transform_1, window_bounds = array<i64: 2>}, {transform_indices = @transform_2, window_bounds = array<i64: 1, 4, 256>}, {transform_indices = @transform_3, window_bounds = array<i64: 1, 2, 256>}]} {
    %c0 = arith.constant 0 : index
    %c0_0 = arith.constant 0 : index
    %c0_1 = arith.constant 0 : index
    %0 = vector.load %arg4[%c0, %c0_0, %c0_1] : memref<1x4x256xf32, #tpu.memory_space<vmem>>, vector<1x4x256xf32>
    %1 = vector.shape_cast %0 : vector<1x4x256xf32> to vector<4x256xf32>
    %2 = vector.extract_strided_slice %1 {offsets = [0, 0], sizes = [1, 256], strides = [1, 1]} : vector<4x256xf32> to vector<1x256xf32>
    %c0_2 = arith.constant 0 : index
    %3 = memref.load %arg2[%c0_2] : memref<8xf32, #tpu.memory_space<smem>>
    %4 = vector.broadcast %3 : f32 to vector<1x256xf32>
    %5 = arith.mulf %2, %4 : vector<1x256xf32>
    %6 = vector.extract_strided_slice %1 {offsets = [1, 0], sizes = [1, 256], strides = [1, 1]} : vector<4x256xf32> to vector<1x256xf32>
    %c2 = arith.constant 2 : index
    %7 = memref.load %arg2[%c2] : memref<8xf32, #tpu.memory_space<smem>>
    %8 = vector.broadcast %7 : f32 to vector<1x256xf32>
    %9 = arith.mulf %6, %8 : vector<1x256xf32>
    %10 = arith.addf %5, %9 : vector<1x256xf32>
    %11 = vector.extract_strided_slice %1 {offsets = [2, 0], sizes = [1, 256], strides = [1, 1]} : vector<4x256xf32> to vector<1x256xf32>
    %c4 = arith.constant 4 : index
    %12 = memref.load %arg2[%c4] : memref<8xf32, #tpu.memory_space<smem>>
    %13 = vector.broadcast %12 : f32 to vector<1x256xf32>
    %14 = arith.mulf %11, %13 : vector<1x256xf32>
    %15 = arith.addf %10, %14 : vector<1x256xf32>
    %16 = vector.extract_strided_slice %1 {offsets = [3, 0], sizes = [1, 256], strides = [1, 1]} : vector<4x256xf32> to vector<1x256xf32>
    %c6 = arith.constant 6 : index
    %17 = memref.load %arg2[%c6] : memref<8xf32, #tpu.memory_space<smem>>
    %18 = vector.broadcast %17 : f32 to vector<1x256xf32>
    %19 = arith.mulf %16, %18 : vector<1x256xf32>
    %20 = arith.addf %15, %19 : vector<1x256xf32>
    %c0_3 = arith.constant 0 : index
    %21 = memref.load %arg3[%c0_3] : memref<2xf32, #tpu.memory_space<smem>>
    %22 = vector.broadcast %21 : f32 to vector<1x256xf32>
    %23 = arith.addf %20, %22 : vector<1x256xf32>
    %cst = arith.constant 1.000000e+00 : f32
    %24 = vector.broadcast %cst : f32 to vector<1x256xf32>
    %25 = arith.addf %23, %24 : vector<1x256xf32>
    %cst_4 = arith.constant 5.000000e-01 : f32
    %26 = vector.broadcast %cst_4 : f32 to vector<1x256xf32>
    %27 = arith.mulf %25, %26 : vector<1x256xf32>
    %cst_5 = arith.constant 1.000000e+00 : f32
    %28 = vector.broadcast %cst_5 : f32 to vector<1x256xf32>
    %29 = arith.mulf %27, %28 : vector<1x256xf32>
    %c0_6 = arith.constant 0 : index
    %c0_7 = arith.constant 0 : index
    %c0_8 = arith.constant 0 : index
    %30 = vector.load %arg5[%c0_6, %c0_7, %c0_8] : memref<1x2x256xf32, #tpu.memory_space<vmem>>, vector<1x1x256xf32>
    %31 = vector.shape_cast %30 : vector<1x1x256xf32> to vector<1x256xf32>
    %32 = vector.shape_cast %29 : vector<1x256xf32> to vector<1x1x256xf32>
    tpu.vector_store %arg5[%c0_6, %c0_7, %c0_8], %32 {strides = array<i32>} : memref<1x2x256xf32, #tpu.memory_space<vmem>>, vector<1x1x256xf32>,
    %33 = vector.extract_strided_slice %1 {offsets = [0, 0], sizes = [1, 256], strides = [1, 1]} : vector<4x256xf32> to vector<1x256xf32>
    %c1 = arith.constant 1 : index
    %34 = memref.load %arg2[%c1] : memref<8xf32, #tpu.memory_space<smem>>
    %35 = vector.broadcast %34 : f32 to vector<1x256xf32>
    %36 = arith.mulf %33, %35 : vector<1x256xf32>
    %37 = vector.extract_strided_slice %1 {offsets = [1, 0], sizes = [1, 256], strides = [1, 1]} : vector<4x256xf32> to vector<1x256xf32>
    %c3 = arith.constant 3 : index
    %38 = memref.load %arg2[%c3] : memref<8xf32, #tpu.memory_space<smem>>
    %39 = vector.broadcast %38 : f32 to vector<1x256xf32>
    %40 = arith.mulf %37, %39 : vector<1x256xf32>
    %41 = arith.addf %36, %40 : vector<1x256xf32>
    %42 = vector.extract_strided_slice %1 {offsets = [2, 0], sizes = [1, 256], strides = [1, 1]} : vector<4x256xf32> to vector<1x256xf32>
    %c5 = arith.constant 5 : index
    %43 = memref.load %arg2[%c5] : memref<8xf32, #tpu.memory_space<smem>>
    %44 = vector.broadcast %43 : f32 to vector<1x256xf32>
    %45 = arith.mulf %42, %44 : vector<1x256xf32>
    %46 = arith.addf %41, %45 : vector<1x256xf32>
    %47 = vector.extract_strided_slice %1 {offsets = [3, 0], sizes = [1, 256], strides = [1, 1]} : vector<4x256xf32> to vector<1x256xf32>
    %c7 = arith.constant 7 : index
    %48 = memref.load %arg2[%c7] : memref<8xf32, #tpu.memory_space<smem>>
    %49 = vector.broadcast %48 : f32 to vector<1x256xf32>
    %50 = arith.mulf %47, %49 : vector<1x256xf32>
    %51 = arith.addf %46, %50 : vector<1x256xf32>
    %c1_9 = arith.constant 1 : index
    %52 = memref.load %arg3[%c1_9] : memref<2xf32, #tpu.memory_space<smem>>
    %53 = vector.broadcast %52 : f32 to vector<1x256xf32>
    %54 = arith.addf %51, %53 : vector<1x256xf32>
    %cst_10 = arith.constant 1.000000e+00 : f32
    %55 = vector.broadcast %cst_10 : f32 to vector<1x256xf32>
    %56 = arith.addf %54, %55 : vector<1x256xf32>
    %cst_11 = arith.constant 5.000000e-01 : f32
    %57 = vector.broadcast %cst_11 : f32 to vector<1x256xf32>
    %58 = arith.mulf %56, %57 : vector<1x256xf32>
    %cst_12 = arith.constant 1.000000e+00 : f32
    %59 = vector.broadcast %cst_12 : f32 to vector<1x256xf32>
    %60 = arith.mulf %58, %59 : vector<1x256xf32>
    %c0_13 = arith.constant 0 : index
    %c1_14 = arith.constant 1 : index
    %c0_15 = arith.constant 0 : index
    %61 = vector.load %arg5[%c0_13, %c1_14, %c0_15] : memref<1x2x256xf32, #tpu.memory_space<vmem>>, vector<1x1x256xf32>
    %62 = vector.shape_cast %61 : vector<1x1x256xf32> to vector<1x256xf32>
    %63 = vector.shape_cast %60 : vector<1x256xf32> to vector<1x1x256xf32>
    tpu.vector_store %arg5[%c0_13, %c1_14, %c0_15], %63 {strides = array<i32>} : memref<1x2x256xf32, #tpu.memory_space<vmem>>, vector<1x1x256xf32>,
    return
  }
  func.func @transform_0(%arg0: i32, %arg1: i32) -> i32 {
    %c0_i32 = arith.constant 0 : i32
    %c0_i32_0 = arith.constant 0 : i32
    return %c0_i32 : i32
  }
  func.func @transform_1(%arg0: i32, %arg1: i32) -> i32 {
    %c0_i32 = arith.constant 0 : i32
    %c0_i32_0 = arith.constant 0 : i32
    return %c0_i32 : i32
  }
  func.func @transform_2(%arg0: i32, %arg1: i32) -> (i32, i32, i32) {
    %c0_i32 = arith.constant 0 : i32
    %c0_i32_0 = arith.constant 0 : i32
    return %arg0, %c0_i32, %arg1 : i32, i32, i32
  }
  func.func @transform_3(%arg0: i32, %arg1: i32) -> (i32, i32, i32) {
    %c0_i32 = arith.constant 0 : i32
    %c0_i32_0 = arith.constant 0 : i32
    return %arg0, %c0_i32, %arg1 : i32, i32, i32
  }
}

</mosaic_0001>

<llo_original>
// kernel: tpu_custom_call.1
$region0: #{tpu_custom_call.1}
  #allocation0 [shape = 'u32[]', space=smem, size = 0x4, offset = 0x4, fixed_abs, tag = 'smem constant byte address 0x4 - core index']
  #allocation1 [shape = 'u32[144,128]{1,0:T(1,128)}', space=vmem, size = 0x12000, scoped, tag = 'internal scratch']
  %s0 = inlined_call_operand.hbm [shape: f32[8], index: 0, kind: input, shape index: {}]
  %s1 = inlined_call_operand.vmem [shape: f32[2], index: 1, kind: input, shape index: {}]
  %s2 = inlined_call_operand.hbm [shape: f32[2,4,256], index: 2, kind: input, shape index: {}]
  %s3 = inlined_call_operand.hbm [shape: f32[2,2,256], index: 3, kind: output, shape index: {}]
  %s4 = sld [smem:[#allocation0]]
  $region57: #{tpu_custom_call.1} parent=0
    _
  %s6 = ssub.s32 1, %s4
  %s7 = scalar_select 0, %s6, %s4
  $region1: #{tpu_custom_call.1} parent=0
    #allocation2 [shape = 'u8[512]{0}', space=smem, size = 0x200, scoped, tag = 'input window, operand 0, single buffered']
    #allocation3 [shape = 's32[2]{0}', space=sflag, size = 0x8, scoped, tag = 'scoped memory for tpu_custom_call.1']
    #allocation4 [shape = 's32[2]{0}', space=sflag, size = 0x8, scoped, tag = 'scoped memory for tpu_custom_call.1']
    #allocation5 [shape = 's32[2]{0}', space=sflag, size = 0x8, scoped, tag = 'scoped memory for tpu_custom_call.1']
    #allocation6 [shape = 's32[2]{0}', space=sflag, size = 0x8, scoped, tag = 'scoped memory for tpu_custom_call.1']
    #allocation7 [shape = 'u8[512]{0}', space=smem, size = 0x200, scoped, tag = 'input window, operand 1, single buffered']
    #allocation8 [shape = 'u8[8192]{0}', space=vmem, size = 0x2000, scoped, tag = 'input window, operand 2']
    #allocation9 [shape = 'u8[4096]{0}', space=vmem, size = 0x1000, scoped, tag = 'output window, operand 0']
    %8 = vsyncpa [#allocation5], 0
    %9 = vsyncpa [#allocation6], 0
    %10 = vsyncpa [#allocation3], 0
    %s11 = scalar_lea.sflag [#allocation3], 1
    %12 = vsyncpa %s11, 0
    %13 = vsyncpa [#allocation4], 0
    %s14 = scalar_lea.sflag [#allocation4], 1
    %15 = vsyncpa %s14, 0
    loop: start=0, step=1, limit=4
    $region2: #{tpu_custom_call.1} parent=1 // loop_pre_header
      _
    $region3: #{tpu_custom_call.1} parent=1 // loop_header
      %s17 = sphi 0, %s21
      %p18 = scmp.ge.s32.totalorder %s17, 4
      %s24 = sphi 0, %s36
      %s25 = sphi 0, %s32
      %s26 = sphi 0, %s24
      %s27 = sphi 0, %s25
      %s28 = sphi 0, %s26
      %s29 = sphi 0, %s27
      %s37 = sphi 0, %s37
      %s39 = sphi 0, %s37
      %s40 = sphi 0, %s39
      %s54 = sphi 0, %s40
      %s58 = sphi 0, %s58
      %s60 = sphi 0, %s58
      %s61 = sphi 0, %s60
      %s75 = sphi 0, %s61
      %s83 = sphi 0, %s85
      %s86 = sphi 0, %s83
      %s87 = sphi 0, %s86
      %s103 = sphi 0, %s87
      %s111 = sphi 0, %s113
      %s114 = sphi 0, %s111
      %s115 = sphi 0, %s114
      %s131 = sphi 0, %s115
    $region4: #{tpu_custom_call.1} parent=1 // loop_header_branch
      %20 = sbr.rel (%p18) target = $region8
    $region5: #{tpu_custom_call.1} parent=1 // loop_body
      %s22 = ssub.s32 %s17, 1
      %s23 = ssub.s32 %s17, 2
      %s30 = sadd.s32 1, %s25
      %p31 = scmp.ge.s32.totalorder %s30, 1
      %s32 = scalar_select %p31, 0, %s30
      %s33 = sadd.s32 1, %s24
      %s34 = scalar_select %p31, %s33, %s24
      %p35 = scmp.ge.s32.totalorder %s34, 2
      %s36 = scalar_select %p35, 0, %s34
      %s38 = sadd.s32 %s37, 1
      %p41 = scmp.eq.s32.totalorder %s17, 1
      %p42 = scmp.ne.s32.totalorder %s37, %s39
      %p43 = scmp.eq.s32.totalorder %s17, 0
      %p44 = por %p42, %p43
      %p45 = scmp.ne.s32.totalorder %s37, %s39
      %p46 = scmp.eq.s32.totalorder %s22, 1
      %p47 = por %p45, %p46
      %p48 = scmp.ne.s32.totalorder %s39, %s40
      %p49 = scmp.eq.s32.totalorder %s22, 0
      %p50 = por %p48, %p49
      %p51 = scmp.ne.s32.totalorder %s39, %s40
      %p52 = scmp.eq.s32.totalorder %s23, 1
      %p53 = por %p51, %p52
      %p55 = scmp.ne.s32.totalorder %s40, %s54
      %p56 = scmp.eq.s32.totalorder %s23, 0
      %p57 = por %p55, %p56
      %s59 = sadd.s32 %s58, 1
      %p62 = scmp.eq.s32.totalorder %s17, 1
      %p63 = scmp.ne.s32.totalorder %s58, %s60
      %p64 = scmp.eq.s32.totalorder %s17, 0
      %p65 = por %p63, %p64
      %p66 = scmp.ne.s32.totalorder %s58, %s60
      %p67 = scmp.eq.s32.totalorder %s22, 1
      %p68 = por %p66, %p67
      %p69 = scmp.ne.s32.totalorder %s60, %s61
      %p70 = scmp.eq.s32.totalorder %s22, 0
      %p71 = por %p69, %p70
      %p72 = scmp.ne.s32.totalorder %s60, %s61
      %p73 = scmp.eq.s32.totalorder %s23, 1
      %p74 = por %p72, %p73
      %p76 = scmp.ne.s32.totalorder %s61, %s75
      %p77 = scmp.eq.s32.totalorder %s23, 0
      %p78 = por %p76, %p77
      %s79 = ssub.s32 %s24, %s36
      %s80 = ssub.s32 %s25, %s32
      %s81 = sor.u32 %s79, %s80
      %p82 = scmp.eq.s32.totalorder %s81, 0
      %s84 = sadd.s32 %s83, 1
      %s85 = scalar_select %p82, %s83, %s84
      %p88 = pneg %p82
      %p89 = scmp.eq.s32.totalorder %s17, 1
      %p90 = por %p88, %p89
      %p91 = scmp.ne.s32.totalorder %s83, %s86
      %p92 = scmp.eq.s32.totalorder %s17, 0
      %p93 = por %p91, %p92
      %p94 = scmp.ne.s32.totalorder %s83, %s86
      %p95 = scmp.eq.s32.totalorder %s22, 1
      %p96 = por %p94, %p95
      %p97 = scmp.ne.s32.totalorder %s86, %s87
      %p98 = scmp.eq.s32.totalorder %s22, 0
      %p99 = por %p97, %p98
      %p100 = scmp.ne.s32.totalorder %s86, %s87
      %p101 = scmp.eq.s32.totalorder %s23, 1
      %p102 = por %p100, %p101
      %p104 = scmp.ne.s32.totalorder %s87, %s103
      %p105 = scmp.eq.s32.totalorder %s23, 0
      %p106 = por %p104, %p105
      %s107 = ssub.s32 %s24, %s36
      %s108 = ssub.s32 %s25, %s32
      %s109 = sor.u32 %s107, %s108
      %p110 = scmp.eq.s32.totalorder %s109, 0
      %s112 = sadd.s32 %s111, 1
      %s113 = scalar_select %p110, %s111, %s112
      %p116 = pneg %p110
      %p117 = scmp.eq.s32.totalorder %s17, 1
      %p118 = por %p116, %p117
      %p119 = scmp.ne.s32.totalorder %s111, %s114
      %p120 = scmp.eq.s32.totalorder %s17, 0
      %p121 = por %p119, %p120
      %p122 = scmp.ne.s32.totalorder %s111, %s114
      %p123 = scmp.eq.s32.totalorder %s22, 1
      %p124 = por %p122, %p123
      %p125 = scmp.ne.s32.totalorder %s114, %s115
      %p126 = scmp.eq.s32.totalorder %s22, 0
      %p127 = por %p125, %p126
      %p128 = scmp.ne.s32.totalorder %s114, %s115
      %p129 = scmp.eq.s32.totalorder %s23, 1
      %p130 = por %p128, %p129
      %p132 = scmp.ne.s32.totalorder %s115, %s131
      %p133 = scmp.eq.s32.totalorder %s23, 0
      %p134 = por %p132, %p133
      %p135 = scmp.le.s32.totalorder 1, %s17
      %p136 = scmp.lt.s32.totalorder %s17, 3
      %p137 = pnand %p135, %p136
      %p138 = pneg %p137
      // Predicated region
      $region9: #{tpu_custom_call.1} parent=5 // pred_check
        _
      $region10: #{tpu_custom_call.1} parent=5 // pred_check_branch
        %140 = sbr.rel (%p137) target = $region12
      $region11: #{tpu_custom_call.1} parent=5 // pred_region
        %s141 = ssub.s32 %s17, 1
        // Predicated region
        $region13: #{tpu_custom_call.1} parent=11 // pred_check
          %p142 = pneg %p50
        $region14: #{tpu_custom_call.1} parent=11 // pred_check_branch
          %144 = sbr.rel (%p142) target = $region16
        $region15: #{tpu_custom_call.1} parent=11 // pred_region
          %s146 = ssub.s32 16, 16
          %147 = vsyncadd [#allocation5], %s146
          %150 = dma.hbm_to_smem %s0, 16, [#allocation2], [#allocation5]
        $region16: #{tpu_custom_call.1} parent=11 // pred_fallthru
          _
        // Predicated region
        $region17: #{tpu_custom_call.1} parent=11 // pred_check
          %p151 = pneg %p71
        $region18: #{tpu_custom_call.1} parent=11 // pred_check_branch
          %153 = sbr.rel (%p151) target = $region20
        $region19: #{tpu_custom_call.1} parent=11 // pred_region
          %s155 = ssub.s32 16, 16
          %156 = vsyncadd [#allocation6], %s155
          %s158 = sshll.u32 %s1, 4
          %s159 = int_to_ptr.vmem [resolvable:$true] %s158
          %161 = dma.vmem_to_smem %s159, 16, [#allocation7], [#allocation6]
        $region20: #{tpu_custom_call.1} parent=11 // pred_fallthru
          _
      $region12: #{tpu_custom_call.1} parent=5 // pred_fallthru
        _
      %p162 = scmp.lt.s32.totalorder %s17, 2
      // Predicated region
      $region21: #{tpu_custom_call.1} parent=5 // pred_check
        %p163 = pneg %p162
      $region22: #{tpu_custom_call.1} parent=5 // pred_check_branch
        %165 = sbr.rel (%p163) target = $region24
      $region23: #{tpu_custom_call.1} parent=5 // pred_region
        // Predicated region
        $region25: #{tpu_custom_call.1} parent=23 // pred_check
          %p166 = pneg %p93
        $region26: #{tpu_custom_call.1} parent=23 // pred_check_branch
          %168 = sbr.rel (%p166) target = $region28
        $region27: #{tpu_custom_call.1} parent=23 // pred_region
          %s169 = sand.u32 %s83, 1
          %s170 = scalar_lea.sflag [#allocation3], %s169
          %s171 = sand.u32 %s83, 1
          %s172 = smul.addr %s171, 8
          %s173 = scalar_lea.vmem [#allocation8], %s172
          %s174 = smul.u32 2, %s25
          %s176 = ssub.s32 128, 128
          %177 = vsyncadd %s170, %s176
          %s178 = smul.addr %s24, 2
          %s179 = sadd.s32 %s174, %s178
          %s180 = smul.addr %s179, 64
          %s181 = scalar_lea.hbm %s2, %s180
          %s183 = sshll.u32 %s173, 4
          %s184 = int_to_ptr.vmem [resolvable:$true] %s183
          %186 = dma.hbm_to_vmem [thread:$0]  %s181, 128, %s184, %s170
        $region28: #{tpu_custom_call.1} parent=23 // pred_fallthru
          _
      $region24: #{tpu_custom_call.1} parent=5 // pred_fallthru
        _
      %p187 = scmp.le.s32.totalorder 1, %s17
      %p188 = scmp.lt.s32.totalorder %s17, 3
      %p189 = pnand %p187, %p188
      %p190 = pneg %p189
      // Predicated region
      $region29: #{tpu_custom_call.1} parent=5 // pred_check
        _
      $region30: #{tpu_custom_call.1} parent=5 // pred_check_branch
        %192 = sbr.rel (%p189) target = $region32
      $region31: #{tpu_custom_call.1} parent=5 // pred_region
        %s193 = ssub.s32 %s17, 1
        // Predicated region
        $region33: #{tpu_custom_call.1} parent=31 // pred_check
          %p194 = pneg %p50
        $region34: #{tpu_custom_call.1} parent=31 // pred_check_branch
          %196 = sbr.rel (%p194) target = $region36
        $region35: #{tpu_custom_call.1} parent=31 // pred_region
          %197 = dma.done [#allocation5], 16
        $region36: #{tpu_custom_call.1} parent=31 // pred_fallthru
          _
        // Predicated region
        $region37: #{tpu_custom_call.1} parent=31 // pred_check
          %p198 = pneg %p71
        $region38: #{tpu_custom_call.1} parent=31 // pred_check_branch
          %200 = sbr.rel (%p198) target = $region40
        $region39: #{tpu_custom_call.1} parent=31 // pred_region
          %201 = dma.done [#allocation6], 16
        $region40: #{tpu_custom_call.1} parent=31 // pred_fallthru
          _
        %s202 = sand.u32 %s86, 1
        %s203 = scalar_lea.sflag [#allocation3], %s202
        %s204 = sand.u32 %s86, 1
        %s205 = smul.addr %s204, 8
        %s206 = scalar_lea.vmem [#allocation8], %s205
        // Predicated region
        $region41: #{tpu_custom_call.1} parent=31 // pred_check
          %p207 = pneg %p99
        $region42: #{tpu_custom_call.1} parent=31 // pred_check_branch
          %209 = sbr.rel (%p207) target = $region44
        $region43: #{tpu_custom_call.1} parent=31 // pred_region
          %210 = dma.done %s203, 128
        $region44: #{tpu_custom_call.1} parent=31 // pred_fallthru
          _
        %211 = sfence
        %p212 = pneg %p50
        %p213 = pneg %p47
        %p214 = pneg %p71
        %p215 = pneg %p68
        %s216 = sand.u32 %s86, 1
        %s217 = scalar_lea.sflag [#allocation3], %s216
        %s218 = sand.u32 %s86, 1
        %s219 = smul.addr %s218, 8
        %s220 = scalar_lea.vmem [#allocation8], %s219
        %p221 = pneg %p99
        %p222 = pneg %p96
        %p223 = pneg %p127
        %p224 = pneg %p124
        %s225 = sand.u32 %s114, 1
        %s226 = scalar_lea.sflag [#allocation4], %s225
        %s227 = sand.u32 %s114, 1
        %s228 = smul.addr %s227, 4
        %s229 = scalar_lea.vmem [#allocation9], %s228
        %s230 = smul.u32 2, %s27
        %s231 = smul.u32 2, %s27
        %v232 = vld [vmem:[%s206] sm:$0xff]
        %s233 = sld [smem:[#allocation2]]
        %v234 = vstv %s233
        %v235 = vmul.f32 %v232, %v234
        %s236 = sld [smem:[#allocation2 + $0x2]]
        %v237 = vstv %s236
        %v238 = vmul.f32 %v232, %v237
        %v240 = vrot.slane %v238, 5
        %v241 = vrot.slane %v240, 4
        %v243 = vadd.f32 %v235, %v241
        %s244 = sld [smem:[#allocation2 + $0x4]]
        %v245 = vstv %s244
        %v246 = vmul.f32 %v232, %v245
        %v248 = vrot.slane %v246, 6
        %v249 = vrot.slane %v248, 4
        %v251 = vadd.f32 %v243, %v249
        %s252 = sld [smem:[#allocation2 + $0x6]]
        %v253 = vstv %s252
        %v254 = vmul.f32 %v232, %v253
        %v256 = vrot.slane %v254, 7
        %v257 = vrot.slane %v256, 4
        %v259 = vadd.f32 %v251, %v257
        %s260 = sld [smem:[#allocation7]]
        %v261 = vstv %s260
        %v262 = vadd.f32 %v259, %v261
        %v263 = vadd.f32 %v262, 1.0
        %v264 = vmul.f32 %v263, 0.5
        %v267 = vunpack.c.l.s4 1966171168
        %v268 = vunpack.c.0.s8 %v267
        %v269 = vlaneseq
        %v270 = vshrl.u32 %v269, 7
        %v271 = vsub.s32 %v268, %v270
        %v272 = vrot.slane %v264, %v271
        %v274 = vunpack.c.l.s4 1966171168
        %v275 = vunpack.c.0.s8 %v274
        %v276 = vlaneseq
        %v277 = vshrl.u32 %v276, 7
        %v278 = vsub.s32 %v275, %v277
        %v279 = vrot.slane %v272, %v278
        %v281 = vlaneseq
        %vm282 = vcmp.ge.s32.totalorder %v281, 0
        %vm283 = vcmp.lt.s32.totalorder %v281, 256
        %vm284 = vmand %vm282, %vm283
        %285 = vst.msk [vmem:[%s229] ss:$2 sm:$0x3] %vm284, %v279
        %s286 = sld [smem:[#allocation2 + $0x1]]
        %v287 = vstv %s286
        %v288 = vmul.f32 %v232, %v287
        %s289 = sld [smem:[#allocation2 + $0x3]]
        %v290 = vstv %s289
        %v291 = vmul.f32 %v232, %v290
        %v293 = vrot.slane %v291, 5
        %v294 = vrot.slane %v293, 4
        %v296 = vadd.f32 %v288, %v294
        %s297 = sld [smem:[#allocation2 + $0x5]]
        %v298 = vstv %s297
        %v299 = vmul.f32 %v232, %v298
        %v301 = vrot.slane %v299, 6
        %v302 = vrot.slane %v301, 4
        %v304 = vadd.f32 %v296, %v302
        %s305 = sld [smem:[#allocation2 + $0x7]]
        %v306 = vstv %s305
        %v307 = vmul.f32 %v232, %v306
        %v309 = vrot.slane %v307, 7
        %v310 = vrot.slane %v309, 4
        %v312 = vadd.f32 %v304, %v310
        %s313 = sld [smem:[#allocation7 + $0x1]]
        %v314 = vstv %s313
        %v315 = vadd.f32 %v312, %v314
        %v316 = vadd.f32 %v315, 1.0
        %v317 = vmul.f32 %v316, 0.5
        %v320 = vunpack.c.l.s4 1966171168
        %v321 = vunpack.c.0.s8 %v320
        %v322 = vlaneseq
        %v323 = vshrl.u32 %v322, 7
        %v324 = vsub.s32 %v321, %v323
        %v325 = vrot.slane %v317, %v324
        %v327 = vunpack.c.l.s4 1966171168
        %v328 = vunpack.c.0.s8 %v327
        %v329 = vlaneseq
        %v330 = vshrl.u32 %v329, 7
        %v331 = vsub.s32 %v328, %v330
        %v332 = vrot.slane %v325, %v331
        %s334 = scalar_lea.vmem %s229, 1 [#allocation9]
        %335 = vst.msk [vmem:[%s334] ss:$2 sm:$0x3] %vm284, %v332
        %s336 = sand.u32 %s114, 1
        %s337 = scalar_lea.sflag [#allocation4], %s336
        %s338 = sand.u32 %s114, 1
        %s339 = smul.addr %s338, 4
        %s340 = scalar_lea.vmem [#allocation9], %s339
        // Predicated region
        $region45: #{tpu_custom_call.1} parent=31 // pred_check
          %p341 = pneg %p124
        $region46: #{tpu_custom_call.1} parent=31 // pred_check_branch
          %343 = sbr.rel (%p341) target = $region48
        $region47: #{tpu_custom_call.1} parent=31 // pred_region
          %s344 = smul.u32 2, %s27
          %s346 = ssub.s32 64, 64
          %347 = vsyncadd %s337, %s346
          %s348 = smul.addr %s26, 2
          %s349 = sadd.s32 %s344, %s348
          %s350 = smul.addr %s349, 32
          %s351 = scalar_lea.hbm %s3, %s350
          %s353 = sshll.u32 %s340, 4
          %s354 = int_to_ptr.vmem [resolvable:$true] %s353
          %356 = dma.vmem_to_hbm [thread:$0]  %s354, 64, %s351, %s337
        $region48: #{tpu_custom_call.1} parent=31 // pred_fallthru
          _
      $region32: #{tpu_custom_call.1} parent=5 // pred_fallthru
        _
      %p357 = scmp.le.s32.totalorder 2, %s17
      // Predicated region
      $region49: #{tpu_custom_call.1} parent=5 // pred_check
        %p358 = pneg %p357
      $region50: #{tpu_custom_call.1} parent=5 // pred_check_branch
        %360 = sbr.rel (%p358) target = $region52
      $region51: #{tpu_custom_call.1} parent=5 // pred_region
        %s361 = ssub.s32 %s17, 2
        // Predicated region
        $region53: #{tpu_custom_call.1} parent=51 // pred_check
          %p362 = pneg %p130
        $region54: #{tpu_custom_call.1} parent=51 // pred_check_branch
          %364 = sbr.rel (%p362) target = $region56
        $region55: #{tpu_custom_call.1} parent=51 // pred_region
          %s365 = sand.u32 %s115, 1
          %s366 = scalar_lea.sflag [#allocation4], %s365
          %s367 = sand.u32 %s115, 1
          %s368 = smul.addr %s367, 4
          %s369 = scalar_lea.vmem [#allocation9], %s368
          %370 = dma.done %s366, 64
        $region56: #{tpu_custom_call.1} parent=51 // pred_fallthru
          _
      $region52: #{tpu_custom_call.1} parent=5 // pred_fallthru
        _
    $region6: #{tpu_custom_call.1} parent=1 // loop_footer
      %s21 = sadd.s32 1, %s17
    $region7: #{tpu_custom_call.1} parent=1 // loop_footer_branch
      %16 = sbr.rel target = $region3
    $region8: #{tpu_custom_call.1} parent=1 // loop_exit
      _
    %371 = vsyncpa [#allocation3], 1
    %s372 = scalar_lea.sflag [#allocation3], 1
    %373 = vsyncpa %s372, 1
    %374 = vsyncpa [#allocation4], 1
    %s375 = scalar_lea.sflag [#allocation4], 1
    %376 = vsyncpa %s375, 1
    %377 = vsyncpa [#allocation5], 1
    %s378 = scalar_lea.sflag [#allocation5], 1
    %379 = vsyncpa %s378, 1
    %380 = vsyncpa [#allocation6], 1
    %s381 = scalar_lea.sflag [#allocation6], 1
    %382 = vsyncpa %s381, 1

</llo_original>
